<compile_context>
chip_gen: v7x
topology: tpu7x:2x2x1
jax: 0.10.0
libtpu: 0.0.40
codegen_flags: <defaults>
</compile_context>

<pallas_src>
import jax
import jax.numpy as jnp
from jax.experimental import pallas as pl
from jax.experimental.pallas import tpu as pltpu


def _round_up(x: int, m: int) -> int:
    return ((x + m - 1) // m) * m


def _sublane(dtype) -> int:
    # Sub-32-bit dtypes pack along sublanes: 8 for 4B, 16 for 2B, 32 for 1B.
    return {4: 8, 2: 16, 1: 32}[jnp.dtype(dtype).itemsize]


def _pick_tile(dim_p: int, cap: int, granule: int = 256) -> int:
    """Largest tile <= cap that is a multiple of `granule` and divides dim_p."""
    if dim_p <= cap:
        return dim_p
    best = granule
    t = granule
    while t <= cap:
        if dim_p % t == 0:
            best = t
        t += granule
    return best


# ----------------------------- kernels ---------------------------------------

def _linear_acc_out_kernel(x_ref, w_ref, b_ref, o_ref):
    # f32 output path: the output block is resident across the K axis
    # (index map is k-invariant), so accumulate directly into o_ref.
    @pl.when(pl.program_id(2) == 0)
    def _():
        o_ref[...] = jnp.zeros_like(o_ref) + b_ref[...].astype(o_ref.dtype)

    o_ref[...] += jnp.dot(x_ref[...], w_ref[...],
                          preferred_element_type=jnp.float32)


def _linear_scratch_kernel(x_ref, w_ref, b_ref, o_ref, acc_ref):
    # Narrow-output path: keep an f32 VMEM accumulator, cast once at the end.
    k = pl.program_id(2)

    @pl.when(k == 0)
    def _():
        acc_ref[...] = jnp.zeros_like(acc_ref) + b_ref[...].astype(jnp.float32)

    acc_ref[...] += jnp.dot(x_ref[...], w_ref[...],
                            preferred_element_type=jnp.float32)

    @pl.when(k == pl.num_programs(2) - 1)
    def _():
        o_ref[...] = acc_ref[...].astype(o_ref.dtype)


# ----------------------------- wrapper ----------------------------------------

def prepare_text_classifier(weight, bias, *, param_dtype=None, granule=256):
    """One-time parameter prep.

    weight: (OUT, IN) PyTorch Linear layout; bias: (OUT,).
    Transposes to (IN, OUT), zero-pads both dims to multiples of `granule`, and
    optionally casts the weight to `param_dtype` (e.g. jnp.bfloat16). Bias is
    kept in f32 for the f32 accumulation.
    """
    OUT, IN = weight.shape
    OUTp = _round_up(OUT, granule)
    INp = _round_up(IN, granule)
    w_t = jnp.pad(weight.T, ((0, INp - IN), (0, OUTp - OUT)))
    if param_dtype is not None:
        w_t = w_t.astype(param_dtype)
    b = jnp.pad(bias.astype(jnp.float32), (0, OUTp - OUT)).reshape(1, OUTp)
    return {"w_t": w_t, "b": b, "in": IN, "out": OUT}


def text_classifier_forward(x, params, *, tm_cap=1024, tn_cap=1024, tk_cap=1024):
    """Equivalent of TextClassifier.forward (single nn.Linear).

    x: (..., IN); params: output of prepare_text_classifier.
    returns: (..., OUT) in x.dtype.
    """
    w_t, b = params["w_t"], params["b"]
    IN, OUT = params["in"], params["out"]
    INp, OUTp = w_t.shape
    assert x.shape[-1] == IN, (x.shape, IN)

    lead = x.shape[:-1]
    out_dtype = x.dtype
    compute_dtype = w_t.dtype                      # activations follow weight dtype
    x2 = x.reshape(-1, IN).astype(compute_dtype)
    B = x2.shape[0]

    sub = _sublane(compute_dtype)
    tm = min(_round_up(tm_cap, sub), _round_up(B, sub))
    Bp = _round_up(B, tm)
    tk = _pick_tile(INp, tk_cap)
    tn = _pick_tile(OUTp, tn_cap)

    grid_m, grid_n, grid_k = Bp // tm, OUTp // tn, INp // tk
    # Keep both v7x TensorCores busy: if both parallel axes collapsed to one
    # tile, split the output axis in two (OUTp is a multiple of 256).
    if grid_m * grid_n == 1 and OUTp >= 512:
        tn = OUTp // 2
        grid_n = 2

    # Per-call padding touches only the (small) activation tensor.
    if Bp != B or INp != IN:
        x2 = jnp.pad(x2, ((0, Bp - B), (0, INp - IN)))

    grid = (grid_m, grid_n, grid_k)

    x_bytes = Bp * INp * jnp.dtype(compute_dtype).itemsize
    w_bytes = INp * OUTp * jnp.dtype(w_t.dtype).itemsize
    o_bytes = Bp * OUTp * jnp.dtype(out_dtype).itemsize
    cost = pl.CostEstimate(
        flops=int(2 * B * IN * OUT),
        transcendentals=0,
        bytes_accessed=int(x_bytes * grid_n + w_bytes * grid_m
                           + OUTp * 4 * grid_m * grid_n + o_bytes),
    )

    in_specs = [
        pl.BlockSpec((tm, tk), lambda i, j, k: (i, k)),   # x        (B, IN)
        pl.BlockSpec((tk, tn), lambda i, j, k: (k, j)),   # weight.T (IN, OUT)
        pl.BlockSpec((1, tn), lambda i, j, k: (0, j)),    # bias     (1, OUT)
    ]
    out_spec = pl.BlockSpec((tm, tn), lambda i, j, k: (i, j))

    if jnp.dtype(out_dtype) == jnp.dtype(jnp.float32):
        kernel, scratch = _linear_acc_out_kernel, []
    else:
        kernel, scratch = _linear_scratch_kernel, [pltpu.VMEM((tm, tn), jnp.float32)]

    out = pl.pallas_call(
        kernel,
        out_shape=jax.ShapeDtypeStruct((Bp, OUTp), out_dtype),
        grid_spec=pltpu.PrefetchScalarGridSpec(
            num_scalar_prefetch=0,
            grid=grid,
            in_specs=in_specs,
            out_specs=out_spec,
            scratch_shapes=scratch,
        ),
        compiler_params=pltpu.CompilerParams(
            dimension_semantics=("parallel", "parallel", "arbitrary"),
            vmem_limit_bytes=48 * 1024 * 1024,
        ),
        cost_estimate=cost,
    )(x2, w_t, b)

    return out[:B, :OUT].reshape(lead + (OUT,))


# ----------------------------- demo / checks ----------------------------------

if __name__ == "__main__":
    key = jax.random.PRNGKey(0)

    # --- 1) Small shapes consistent with the module's forward ----------------
    batch, input_size, output_size = 8, 32, 16
    kx, kw, kb, k2 = jax.random.split(key, 4)

    x = jax.random.normal(kx, (batch, input_size), dtype=jnp.float32)
    bound = 1.0 / (input_size ** 0.5)
    weight = jax.random.uniform(kw, (output_size, input_size),
                                minval=-bound, maxval=bound, dtype=jnp.float32)
    bias = jax.random.uniform(kb, (output_size,),
                              minval=-bound, maxval=bound, dtype=jnp.float32)

    params = prepare_text_classifier(weight, bias)
    y = jax.block_until_ready(text_classifier_forward(x, params))
    y_ref = x @ weight.T + bias
    assert y.shape == (batch, output_size)
    assert jnp.allclose(y, y_ref, atol=1e-5, rtol=1e-5)

    # --- 2) Larger f32 case exercising the (B, OUT, IN) tiling, the k==0
    #        accumulator init, and accumulation directly into o_ref -----------
    B2, IN2, OUT2 = 48, 384, 272
    kx2, kw2, kb2 = jax.random.split(k2, 3)
    x2 = jax.random.normal(kx2, (B2, IN2), dtype=jnp.float32)
    b2 = 1.0 / (IN2 ** 0.5)
    w2 = jax.random.uniform(kw2, (OUT2, IN2), minval=-b2, maxval=b2,
                            dtype=jnp.float32)
    bi2 = jax.random.uniform(kb2, (OUT2,), minval=-b2, maxval=b2,
                             dtype=jnp.float32)

    p2 = prepare_text_classifier(w2, bi2)
    y2 = jax.block_until_ready(
        text_classifier_forward(x2, p2, tm_cap=32, tn_cap=256, tk_cap=256))
    y2_ref = x2 @ w2.T + bi2
    assert y2.shape == (B2, OUT2)
    assert jnp.allclose(y2, y2_ref, atol=1e-4, rtol=1e-4)

    # --- 3) bf16 weights + bf16 activations (scratch-accumulator path) -------
    p3 = prepare_text_classifier(w2, bi2, param_dtype=jnp.bfloat16)
    x3 = x2.astype(jnp.bfloat16)
    y3 = jax.block_until_ready(text_classifier_forward(x3, p3))
    y3_ref = (x3.astype(jnp.float32) @ w2.astype(jnp.bfloat16).astype(jnp.float32).T
              + bi2)
    assert y3.dtype == jnp.bfloat16
    assert jnp.allclose(y3.astype(jnp.float32), y3_ref, atol=2e-2, rtol=2e-2)

    # --- 4) Small batch / OUT >= 512: exercises the megacore tn split --------
    B4, IN4, OUT4 = 8, 256, 512
    kx4, kw4, kb4 = jax.random.split(kx2, 3)
    x4 = jax.random.normal(kx4, (B4, IN4), dtype=jnp.float32)
    b4 = 1.0 / (IN4 ** 0.5)
    w4 = jax.random.uniform(kw4, (OUT4, IN4), minval=-b4, maxval=b4,
                            dtype=jnp.float32)
    bi4 = jax.random.uniform(kb4, (OUT4,), minval=-b4, maxval=b4,
                             dtype=jnp.float32)
    p4 = prepare_text_classifier(w4, bi4)
    y4 = jax.block_until_ready(text_classifier_forward(x4, p4))
    y4_ref = x4 @ w4.T + bi4
    assert jnp.allclose(y4, y4_ref, atol=1e-4, rtol=1e-4)

    print("KERNEL_OK")
</pallas_src>

<mosaic_0001>
module attributes {stable_mosaic.version = 11 : i64} {
  func.func @_linear_acc_out_kernel(%arg0: i32, %arg1: i32, %arg2: i32, %arg3: memref<8x256xf32, #tpu.memory_space<vmem>>, %arg4: memref<256x256xf32, #tpu.memory_space<vmem>>, %arg5: memref<1x256xf32, #tpu.memory_space<vmem>>, %arg6: memref<8x256xf32, #tpu.memory_space<vmem>>) attributes {dimension_semantics = [#tpu.dimension_semantics<parallel>, #tpu.dimension_semantics<parallel>, #tpu.dimension_semantics<arbitrary>], iteration_bounds = array<i64: 1, 1, 1>, scalar_prefetch = 0 : i64, scratch_operands = 0 : i64, tpu.core_type = #tpu.core_type<tc>, window_params = [{transform_indices = @transform_0, window_bounds = array<i64: 8, 256>}, {transform_indices = @transform_1, window_bounds = array<i64: 256, 256>}, {transform_indices = @transform_2, window_bounds = array<i64: 1, 256>}, {transform_indices = @transform_3, window_bounds = array<i64: 8, 256>}]} {
    %c0_i32 = arith.constant 0 : i32
    %0 = arith.cmpi eq, %arg2, %c0_i32 : i32
    %1 = arith.extui %0 : i1 to i32
    %c0_i32_0 = arith.constant 0 : i32
    %2 = arith.cmpi ne, %1, %c0_i32_0 : i32
    scf.if %2 {
      %cst_8 = arith.constant 0.000000e+00 : f32
      %9 = vector.broadcast %cst_8 : f32 to vector<8x256xf32>
      %c0_9 = arith.constant 0 : index
      %c0_10 = arith.constant 0 : index
      %10 = vector.load %arg5[%c0_9, %c0_10] : memref<1x256xf32, #tpu.memory_space<vmem>>, vector<1x256xf32>
      %11 = vector.broadcast %10 : vector<1x256xf32> to vector<8x256xf32>
      %12 = arith.addf %9, %11 : vector<8x256xf32>
      %c0_11 = arith.constant 0 : index
      %c0_12 = arith.constant 0 : index
      %13 = vector.load %arg6[%c0_11, %c0_12] : memref<8x256xf32, #tpu.memory_space<vmem>>, vector<8x256xf32>
      tpu.vector_store %arg6[%c0_11, %c0_12], %12 {strides = array<i32>} : memref<8x256xf32, #tpu.memory_space<vmem>>, vector<8x256xf32>,
    } else {
    }
    %c0 = arith.constant 0 : index
    %c0_1 = arith.constant 0 : index
    %3 = vector.load %arg6[%c0, %c0_1] : memref<8x256xf32, #tpu.memory_space<vmem>>, vector<8x256xf32>
    %c0_2 = arith.constant 0 : index
    %c0_3 = arith.constant 0 : index
    %4 = vector.load %arg3[%c0_2, %c0_3] : memref<8x256xf32, #tpu.memory_space<vmem>>, vector<8x256xf32>
    %c0_4 = arith.constant 0 : index
    %c0_5 = arith.constant 0 : index
    %5 = vector.load %arg4[%c0_4, %c0_5] : memref<256x256xf32, #tpu.memory_space<vmem>>, vector<256x256xf32>
    %cst = arith.constant dense<0.000000e+00> : vector<8x256xf32>
    %6 = tpu.matmul %4, %5, %cst {dimension_numbers = #tpu.dot_dimension_numbers<[1], [0], [0], [1], [0, 0, 1, 1], [], []>} : vector<8x256xf32>, vector<256x256xf32>, vector<8x256xf32> -> vector<8x256xf32>
    %7 = arith.addf %3, %6 : vector<8x256xf32>
    %c0_6 = arith.constant 0 : index
    %c0_7 = arith.constant 0 : index
    %8 = vector.load %arg6[%c0_6, %c0_7] : memref<8x256xf32, #tpu.memory_space<vmem>>, vector<8x256xf32>
    tpu.vector_store %arg6[%c0_6, %c0_7], %7 {strides = array<i32>} : memref<8x256xf32, #tpu.memory_space<vmem>>, vector<8x256xf32>,
    return
  }
  func.func @transform_0(%arg0: i32, %arg1: i32, %arg2: i32) -> (i32, i32) {
    %c0_i32 = arith.constant 0 : i32
    return %arg0, %arg2 : i32, i32
  }
  func.func @transform_1(%arg0: i32, %arg1: i32, %arg2: i32) -> (i32, i32) {
    %c0_i32 = arith.constant 0 : i32
    return %arg2, %arg1 : i32, i32
  }
  func.func @transform_2(%arg0: i32, %arg1: i32, %arg2: i32) -> (i32, i32) {
    %c0_i32 = arith.constant 0 : i32
    %c0_i32_0 = arith.constant 0 : i32
    return %c0_i32, %arg1 : i32, i32
  }
  func.func @transform_3(%arg0: i32, %arg1: i32, %arg2: i32) -> (i32, i32) {
    %c0_i32 = arith.constant 0 : i32
    return %arg0, %arg1 : i32, i32
  }
}

</mosaic_0001>

<llo_original>
// kernel: tpu_custom_call.1
$region0: #{tpu_custom_call.1}
  #allocation0 [shape = 'u32[]', space=smem, size = 0x4, offset = 0x4, fixed_abs, tag = 'smem constant byte address 0x4 - core index']
  #allocation1 [shape = 'u32[144,128]{1,0:T(1,128)}', space=vmem, size = 0x12000, scoped, tag = 'internal scratch']
  %s0 = inlined_call_operand.hbm [shape: f32[8,256], index: 0, kind: input, shape index: {}]
  %s1 = inlined_call_operand.hbm [shape: f32[256,256], index: 1, kind: input, shape index: {}]
  %s2 = inlined_call_operand.vmem [shape: f32[1,256], index: 2, kind: input, shape index: {}]
  %s3 = inlined_call_operand.hbm [shape: f32[8,256], index: 3, kind: output, shape index: {}]
  %s4 = sld [smem:[#allocation0]]
  $region34: #{tpu_custom_call.1} parent=0
    _
  %s6 = ssub.s32 1, %s4
  %s7 = scalar_select 0, %s6, %s4
  $region1: #{tpu_custom_call.1} parent=0
    #allocation2 [shape = 'u8[8192]{0}', space=vmem, size = 0x2000, scoped, tag = 'input window, operand 0, single buffered']
    #allocation3 [shape = 's32[1]{0}', space=sflag, size = 0x4, scoped, tag = 'scoped memory for tpu_custom_call.1']
    #allocation4 [shape = 's32[1]{0}', space=sflag, size = 0x4, scoped, tag = 'scoped memory for tpu_custom_call.1']
    #allocation5 [shape = 'u8[262144]{0}', space=vmem, size = 0x40000, scoped, tag = 'input window, operand 1, single buffered']
    #allocation6 [shape = 's32[1]{0}', space=sflag, size = 0x4, scoped, tag = 'scoped memory for tpu_custom_call.1']
    #allocation7 [shape = 'u8[8192]{0}', space=vmem, size = 0x2000, scoped, tag = 'output window, operand 0, single buffered']
    %8 = vsyncpa [#allocation3], 0
    %9 = vsyncpa [#allocation6], 0
    %10 = vsyncpa [#allocation4], 0
    // Predicated region
    $region2: #{tpu_custom_call.1} parent=1 // pred_check
      _
    $region3: #{tpu_custom_call.1} parent=1 // pred_check_branch
      %12 = sbr.rel (0) target = $region5
    $region4: #{tpu_custom_call.1} parent=1 // pred_region
      %s14 = ssub.s32 256, 256
      %15 = vsyncadd [#allocation3], %s14
      %s17 = sshll.u32 [#allocation2], 4
      %s18 = int_to_ptr.vmem [resolvable:$true] %s17
      %20 = dma.hbm_to_vmem [thread:$0]  %s0, 256, %s18, [#allocation3]
    $region5: #{tpu_custom_call.1} parent=1 // pred_fallthru
      _
    // Predicated region
    $region6: #{tpu_custom_call.1} parent=1 // pred_check
      _
    $region7: #{tpu_custom_call.1} parent=1 // pred_check_branch
      %22 = sbr.rel (0) target = $region9
    $region8: #{tpu_custom_call.1} parent=1 // pred_region
      %s24 = ssub.s32 8192, 8192
      %25 = vsyncadd [#allocation6], %s24
      %s26 = sshll.u32 [#allocation5], 4
      %s27 = int_to_ptr.vmem [resolvable:$true] %s26
      %32 = dma.hbm_to_vmem [thread:$0]  %s1, 8192, %s27, [#allocation6], 256, 256, 16
    $region9: #{tpu_custom_call.1} parent=1 // pred_fallthru
      _
    // Predicated region
    $region10: #{tpu_custom_call.1} parent=1 // pred_check
      _
    $region11: #{tpu_custom_call.1} parent=1 // pred_check_branch
      %34 = sbr.rel (0) target = $region13
    $region12: #{tpu_custom_call.1} parent=1 // pred_region
      _
    $region13: #{tpu_custom_call.1} parent=1 // pred_fallthru
      _
    // Predicated region
    $region14: #{tpu_custom_call.1} parent=1 // pred_check
      _
    $region15: #{tpu_custom_call.1} parent=1 // pred_check_branch
      %36 = sbr.rel (0) target = $region17
    $region16: #{tpu_custom_call.1} parent=1 // pred_region
      %37 = dma.done [#allocation3], 256
    $region17: #{tpu_custom_call.1} parent=1 // pred_fallthru
      _
    // Predicated region
    $region18: #{tpu_custom_call.1} parent=1 // pred_check
      _
    $region19: #{tpu_custom_call.1} parent=1 // pred_check_branch
      %39 = sbr.rel (0) target = $region21
    $region20: #{tpu_custom_call.1} parent=1 // pred_region
      %40 = dma.done [#allocation6], 8192
    $region21: #{tpu_custom_call.1} parent=1 // pred_fallthru
      _
    %p41 = scmp.eq.s32.totalorder 0, 0
    // Predicated region
    $region22: #{tpu_custom_call.1} parent=1 // pred_check
      %p42 = pneg %p41
    $region23: #{tpu_custom_call.1} parent=1 // pred_check_branch
      %44 = sbr.rel (%p42) target = $region25
    $region24: #{tpu_custom_call.1} parent=1 // pred_region
      %v45 = vld [vmem:[%s2] sm:$0x3]
      %v47 = vlaneseq
      %v48 = vshrl.u32 %v47, 7
      %v49 = vsub.s32 0, %v48
      %v50 = vrot.slane %v45, %v49
      %v51 = vlaneseq
      %v52 = vshrl.u32 %v51, 7
      %v53 = vsub.s32 1, %v52
      %v54 = vrot.slane %v45, %v53
      %v57 = vadd.f32 %v50, 0.0
      %v58 = vadd.f32 %v54, 0.0
      %59 = vst [vmem:[#allocation7] sm:$0xff] %v57
      %60 = vst [vmem:[#allocation7 + $0x8] sm:$0xff] %v58
    $region25: #{tpu_custom_call.1} parent=1 // pred_fallthru
      _
    %v61 = vld [vmem:[#allocation7] sm:$0xff]
    %v62 = vld [vmem:[#allocation7 + $0x8] sm:$0xff]
    %v63 = vld [vmem:[#allocation2] sm:$0xff]
    %v64 = vld [vmem:[#allocation2 + $0x8] sm:$0xff]
    %v65 = vld [vmem:[#allocation5] sm:$0xff]
    %v66 = vld [vmem:[#allocation5 + $0x8] sm:$0xff]
    %v67 = vld [vmem:[#allocation5 + $0x10] sm:$0xff]
    %v68 = vld [vmem:[#allocation5 + $0x18] sm:$0xff]
    %v69 = vld [vmem:[#allocation5 + $0x20] sm:$0xff]
    %v70 = vld [vmem:[#allocation5 + $0x28] sm:$0xff]
    %v71 = vld [vmem:[#allocation5 + $0x30] sm:$0xff]
    %v72 = vld [vmem:[#allocation5 + $0x38] sm:$0xff]
    %v73 = vld [vmem:[#allocation5 + $0x40] sm:$0xff]
    %v74 = vld [vmem:[#allocation5 + $0x48] sm:$0xff]
    %v75 = vld [vmem:[#allocation5 + $0x50] sm:$0xff]
    %v76 = vld [vmem:[#allocation5 + $0x58] sm:$0xff]
    %v77 = vld [vmem:[#allocation5 + $0x60] sm:$0xff]
    %v78 = vld [vmem:[#allocation5 + $0x68] sm:$0xff]
    %v79 = vld [vmem:[#allocation5 + $0x70] sm:$0xff]
    %v80 = vld [vmem:[#allocation5 + $0x78] sm:$0xff]
    %v81 = vld [vmem:[#allocation5 + $0x80] sm:$0xff]
    %v82 = vld [vmem:[#allocation5 + $0x88] sm:$0xff]
    %v83 = vld [vmem:[#allocation5 + $0x90] sm:$0xff]
    %v84 = vld [vmem:[#allocation5 + $0x98] sm:$0xff]
    %v85 = vld [vmem:[#allocation5 + $0xa0] sm:$0xff]
    %v86 = vld [vmem:[#allocation5 + $0xa8] sm:$0xff]
    %v87 = vld [vmem:[#allocation5 + $0xb0] sm:$0xff]
    %v88 = vld [vmem:[#allocation5 + $0xb8] sm:$0xff]
    %v89 = vld [vmem:[#allocation5 + $0xc0] sm:$0xff]
    %v90 = vld [vmem:[#allocation5 + $0xc8] sm:$0xff]
    %v91 = vld [vmem:[#allocation5 + $0xd0] sm:$0xff]
    %v92 = vld [vmem:[#allocation5 + $0xd8] sm:$0xff]
    %v93 = vld [vmem:[#allocation5 + $0xe0] sm:$0xff]
    %v94 = vld [vmem:[#allocation5 + $0xe8] sm:$0xff]
    %v95 = vld [vmem:[#allocation5 + $0xf0] sm:$0xff]
    %v96 = vld [vmem:[#allocation5 + $0xf8] sm:$0xff]
    %v97 = vld [vmem:[#allocation5 + $0x100] sm:$0xff]
    %v98 = vld [vmem:[#allocation5 + $0x108] sm:$0xff]
    %v99 = vld [vmem:[#allocation5 + $0x110] sm:$0xff]
    %v100 = vld [vmem:[#allocation5 + $0x118] sm:$0xff]
    %v101 = vld [vmem:[#allocation5 + $0x120] sm:$0xff]
    %v102 = vld [vmem:[#allocation5 + $0x128] sm:$0xff]
    %v103 = vld [vmem:[#allocation5 + $0x130] sm:$0xff]
    %v104 = vld [vmem:[#allocation5 + $0x138] sm:$0xff]
    %v105 = vld [vmem:[#allocation5 + $0x140] sm:$0xff]
    %v106 = vld [vmem:[#allocation5 + $0x148] sm:$0xff]
    %v107 = vld [vmem:[#allocation5 + $0x150] sm:$0xff]
    %v108 = vld [vmem:[#allocation5 + $0x158] sm:$0xff]
    %v109 = vld [vmem:[#allocation5 + $0x160] sm:$0xff]
    %v110 = vld [vmem:[#allocation5 + $0x168] sm:$0xff]
    %v111 = vld [vmem:[#allocation5 + $0x170] sm:$0xff]
    %v112 = vld [vmem:[#allocation5 + $0x178] sm:$0xff]
    %v113 = vld [vmem:[#allocation5 + $0x180] sm:$0xff]
    %v114 = vld [vmem:[#allocation5 + $0x188] sm:$0xff]
    %v115 = vld [vmem:[#allocation5 + $0x190] sm:$0xff]
    %v116 = vld [vmem:[#allocation5 + $0x198] sm:$0xff]
    %v117 = vld [vmem:[#allocation5 + $0x1a0] sm:$0xff]
    %v118 = vld [vmem:[#allocation5 + $0x1a8] sm:$0xff]
    %v119 = vld [vmem:[#allocation5 + $0x1b0] sm:$0xff]
    %v120 = vld [vmem:[#allocation5 + $0x1b8] sm:$0xff]
    %v121 = vld [vmem:[#allocation5 + $0x1c0] sm:$0xff]
    %v122 = vld [vmem:[#allocation5 + $0x1c8] sm:$0xff]
    %v123 = vld [vmem:[#allocation5 + $0x1d0] sm:$0xff]
    %v124 = vld [vmem:[#allocation5 + $0x1d8] sm:$0xff]
    %v125 = vld [vmem:[#allocation5 + $0x1e0] sm:$0xff]
    %v126 = vld [vmem:[#allocation5 + $0x1e8] sm:$0xff]
    %v127 = vld [vmem:[#allocation5 + $0x1f0] sm:$0xff]
    %v128 = vld [vmem:[#allocation5 + $0x1f8] sm:$0xff]
    %129 = vmatprep.subr.mxu0 %v66
    %130 = vmatpush1.msra.mxu0 %v65
    %131 = vmatprep.subr.mxu0 %v68
    %132 = vmatpush1.msra.mxu0 %v67
    %133 = vmatprep.subr.mxu0 %v70
    %134 = vmatpush1.msra.mxu0 %v69
    %135 = vmatprep.subr.mxu0 %v72
    %136 = vmatpush1.msra.mxu0 %v71
    %137 = vmatprep.subr.mxu0 %v74
    %138 = vmatpush1.msra.mxu0 %v73
    %139 = vmatprep.subr.mxu0 %v76
    %140 = vmatpush1.msra.mxu0 %v75
    %141 = vmatprep.subr.mxu0 %v78
    %142 = vmatpush1.msra.mxu0 %v77
    %143 = vmatprep.subr.mxu0 %v80
    %144 = vmatpush1.msra.mxu0 %v79
    %145 = vmatprep.subr.mxu0 %v82
    %146 = vmatpush1.msra.mxu0 %v81
    %147 = vmatprep.subr.mxu0 %v84
    %148 = vmatpush1.msra.mxu0 %v83
    %149 = vmatprep.subr.mxu0 %v86
    %150 = vmatpush1.msra.mxu0 %v85
    %151 = vmatprep.subr.mxu0 %v88
    %152 = vmatpush1.msra.mxu0 %v87
    %153 = vmatprep.subr.mxu0 %v90
    %154 = vmatpush1.msra.mxu0 %v89
    %155 = vmatprep.subr.mxu0 %v92
    %156 = vmatpush1.msra.mxu0 %v91
    %157 = vmatprep.subr.mxu0 %v94
    %158 = vmatpush1.msra.mxu0 %v93
    %159 = vmatprep.subr.mxu0 %v96
    %160 = vmatpush1.msra.mxu0 %v95
    %161 = vmatprep.subr.mxu0 %v98
    %162 = vmatpush1.msra.mxu0 %v97
    %163 = vmatprep.subr.mxu0 %v100
    %164 = vmatpush1.msra.mxu0 %v99
    %165 = vmatprep.subr.mxu0 %v102
    %166 = vmatpush1.msra.mxu0 %v101
    %167 = vmatprep.subr.mxu0 %v104
    %168 = vmatpush1.msra.mxu0 %v103
    %169 = vmatprep.subr.mxu0 %v106
    %170 = vmatpush1.msra.mxu0 %v105
    %171 = vmatprep.subr.mxu0 %v108
    %172 = vmatpush1.msra.mxu0 %v107
    %173 = vmatprep.subr.mxu0 %v110
    %174 = vmatpush1.msra.mxu0 %v109
    %175 = vmatprep.subr.mxu0 %v112
    %176 = vmatpush1.msra.mxu0 %v111
    %177 = vmatprep.subr.mxu0 %v114
    %178 = vmatpush1.msra.mxu0 %v113
    %179 = vmatprep.subr.mxu0 %v116
    %180 = vmatpush1.msra.mxu0 %v115
    %181 = vmatprep.subr.mxu0 %v118
    %182 = vmatpush1.msra.mxu0 %v117
    %183 = vmatprep.subr.mxu0 %v120
    %184 = vmatpush1.msra.mxu0 %v119
    %185 = vmatprep.subr.mxu0 %v122
    %186 = vmatpush1.msra.mxu0 %v121
    %187 = vmatprep.subr.mxu0 %v124
    %188 = vmatpush1.msra.mxu0 %v123
    %189 = vmatprep.subr.mxu0 %v126
    %190 = vmatpush1.msra.mxu0 %v125
    %191 = vmatprep.subr.mxu0 %v128
    %192 = vmatpush1.msra.mxu0 %v127
    %193 = vmatprep.mubr.f32.mxu0 %v64
    %194 = vmatmul.mubr.f32.gmra.mrb[0].mxu0 %v63
    %v195 = vpop.f32.mrb[0].mxu0
    %v196 = vadd.f32 0.0, %v195
    %v197 = vpop.f32.mrb[0].mxu0
    %v198 = vadd.f32 0.0, %v197
    %199 = vdwg.mxu0
    %v200 = vadd.f32 %v61, %v196
    %v201 = vadd.f32 %v62, %v198
    %202 = vst [vmem:[#allocation7] sm:$0xff] %v200
    %203 = vst [vmem:[#allocation7 + $0x8] sm:$0xff] %v201
    // Predicated region
    $region26: #{tpu_custom_call.1} parent=1 // pred_check
      _
    $region27: #{tpu_custom_call.1} parent=1 // pred_check_branch
      %205 = sbr.rel (0) target = $region29
    $region28: #{tpu_custom_call.1} parent=1 // pred_region
      %s207 = ssub.s32 256, 256
      %208 = vsyncadd [#allocation4], %s207
      %s210 = sshll.u32 [#allocation7], 4
      %s211 = int_to_ptr.vmem [resolvable:$true] %s210
      %213 = dma.vmem_to_hbm [thread:$0]  %s211, 256, %s3, [#allocation4]
    $region29: #{tpu_custom_call.1} parent=1 // pred_fallthru
      _
    // Predicated region
    $region30: #{tpu_custom_call.1} parent=1 // pred_check
      _
    $region31: #{tpu_custom_call.1} parent=1 // pred_check_branch
      %215 = sbr.rel (0) target = $region33
    $region32: #{tpu_custom_call.1} parent=1 // pred_region
      %216 = dma.done [#allocation4], 256
    $region33: #{tpu_custom_call.1} parent=1 // pred_fallthru
      _
    %217 = vsyncpa [#allocation3], 1
    %218 = vsyncpa [#allocation6], 1
    %219 = vsyncpa [#allocation4], 1

</llo_original>
